<compile_context>
chip_gen: v7x
topology: tpu7x:2x2x1
jax: 0.10.0
libtpu: 0.0.40
codegen_flags: <defaults>
</compile_context>

<pallas_src>
import math

import jax
import jax.numpy as jnp
from jax import lax
from jax.experimental import pallas as pl
from jax.experimental.pallas import tpu as pltpu


def _shift_lanes(x, amount):
    """Shift along the last (lane) axis; positive -> toward higher lane
    indices.  Vacated lanes are zero-filled."""
    r, l = x.shape
    if amount == 0:
        return x
    if amount > 0:
        return jnp.concatenate(
            [jnp.zeros((r, amount), x.dtype), x[:, : l - amount]], axis=1)
    amount = -amount
    return jnp.concatenate(
        [x[:, amount:], jnp.zeros((r, amount), x.dtype)], axis=1)


def _shift_rows(x, amount):
    """Shift along the first (sublane) axis; positive -> toward higher rows.
    Vacated rows are zero-filled."""
    r, l = x.shape
    if amount == 0:
        return x
    if amount > 0:
        return jnp.concatenate(
            [jnp.zeros((amount, l), x.dtype), x[: r - amount, :]], axis=0)
    amount = -amount
    return jnp.concatenate(
        [x[amount:, :], jnp.zeros((amount, l), x.dtype)], axis=0)


def _make_kernel(C, W):
    def kernel(xp_ref, w_ref, b_ref, o_ref):
        # xp_ref: (H, C*W) VMEM, lane-packed image: xp[h, c*W + w] = x[c, h, w]
        # w_ref : (9, C*W) VMEM, per-tap lane weights
        # b_ref : (1,)     SMEM, conv bias
        # o_ref : (H, C*W) VMEM, lane-dense output slab (valid in lanes [0, W))
        H, CW = xp_ref.shape
        xc = xp_ref[...]

        # Lane index within each W-lane channel block (W is a power of two).
        lane = lax.broadcasted_iota(jnp.int32, (H, CW), 1) % W

        # kw = 0 / 2 taps: +-1 lane shift; zero out lanes whose data crossed a
        # channel-block boundary (the spatial zero-padding at w-1<0 / w+1>=W).
        xl = jnp.where(lane == 0, 0.0, _shift_lanes(xc, 1))       # x[c, i, w-1]
        xr = jnp.where(lane == W - 1, 0.0, _shift_lanes(xc, -1))  # x[c, i, w+1]

        # One accumulator per kernel row kh (independent VALU chains).  Each
        # tap is a single (CW,)-row weight broadcast against the 2-vreg slab.
        acc0 = xl * w_ref[0, :] + xc * w_ref[1, :] + xr * w_ref[2, :]
        acc1 = xl * w_ref[3, :] + xc * w_ref[4, :] + xr * w_ref[5, :]
        acc2 = xl * w_ref[6, :] + xc * w_ref[7, :] + xr * w_ref[8, :]

        # kh = 0 / 2: +-1 sublane shift; zero-filled rows supply the
        # top/bottom spatial halo.
        acc = _shift_rows(acc0, 1) + acc1 + _shift_rows(acc2, -1)

        # Channel reduction: shift-left-by-{W, 2W, ...}-and-add tree.  After
        # log2(C) steps lanes [0, W) hold the sum over all C channel blocks.
        s = W
        while s < CW:
            acc = acc + _shift_lanes(acc, -s)
            s *= 2

        # bias + 0.25 (binary add constant) then relu (unary).
        o_ref[...] = jnp.maximum(acc + (b_ref[0] + jnp.float32(0.25)), 0.0)

    return kernel


@jax.jit
def conv_add_relu(x, weight, bias):
    """x: (1, C, H, W); weight: (1, C, 3, 3); bias: (1,).

    Returns (1, 1, H, W) f32 equal to relu(conv2d(x, weight, bias, pad=1) + 0.25).
    """
    N, C, H, W = x.shape
    assert N == 1, "kernel is specialised to batch 1"
    assert weight.shape == (1, C, 3, 3) and bias.shape == (1,)
    CW = C * W
    # Lane-packed layout assumptions (hold for the 1x8x16x16 test shape).
    assert CW == 128, "lane packing expects C*W == 128"
    assert W & (W - 1) == 0 and C & (C - 1) == 0
    assert H % 8 == 0
    # TODO(synk): general H/W (e.g. the original 122x122 input) needs W-tiling
    # of the lane packing plus a grid over row blocks.

    # Lane-dense image: xp[h, c*W + w] = x[0, c, h, w]   -> (H, 128), ~8 KiB.
    xp = jnp.transpose(x[0].astype(jnp.float32), (1, 0, 2)).reshape(H, CW)

    # Per-tap lane weights: wv[3*kh + kw, c*W + w] = weight[0, c, kh, kw].
    wv = jnp.repeat(
        jnp.transpose(weight[0].astype(jnp.float32), (1, 2, 0)).reshape(9, C),
        W, axis=1)                                               # (9, 128)

    out = pl.pallas_call(
        _make_kernel(C, W),
        out_shape=jax.ShapeDtypeStruct((H, CW), jnp.float32),
        in_specs=[
            pl.BlockSpec(memory_space=pltpu.MemorySpace.VMEM),
            pl.BlockSpec(memory_space=pltpu.MemorySpace.VMEM),
            pl.BlockSpec(memory_space=pltpu.MemorySpace.SMEM),
        ],
        out_specs=pl.BlockSpec(memory_space=pltpu.MemorySpace.VMEM),
    )(xp, wv, bias.astype(jnp.float32))

    # Every W-lane block of `out` holds the full channel sum; take block 0.
    return out[:, :W].reshape(1, 1, H, W)


def _reference(x, weight, bias):
    y = lax.conv_general_dilated(
        x.astype(jnp.float32), weight.astype(jnp.float32),
        window_strides=(1, 1), padding=((1, 1), (1, 1)),
        dimension_numbers=("NCHW", "OIHW", "NCHW"),
        precision=lax.Precision.HIGHEST)
    y = y + bias.reshape(1, -1, 1, 1)
    return jnp.maximum(y + 0.25, 0.0)


if __name__ == "__main__":
    key = jax.random.PRNGKey(0)
    k_x, k_w, k_b = jax.random.split(key, 3)

    # Small shapes consistent with the module: in_channels fixed at 8.
    N, C, H, W = 1, 8, 16, 16
    x = jax.random.normal(k_x, (N, C, H, W), jnp.float32)

    # Deterministic Conv2d(8, 1, 3) params (PyTorch-style uniform fan-in init).
    fan_in = C * 3 * 3
    bound = 1.0 / math.sqrt(fan_in)
    weight = jax.random.uniform(k_w, (1, C, 3, 3), jnp.float32, -bound, bound)
    bias = jax.random.uniform(k_b, (1,), jnp.float32, -bound, bound)

    out = jax.block_until_ready(conv_add_relu(x, weight, bias))

    ref = _reference(x, weight, bias)
    assert out.shape == (1, 1, H, W)
    assert jnp.max(jnp.abs(out - ref)) < 1e-4, "mismatch vs reference conv"

    print("KERNEL_OK")
</pallas_src>

<mosaic_0001>
module attributes {stable_mosaic.version = 11 : i64} {
  func.func @kernel(%arg0: memref<16x128xf32, #tpu.memory_space<vmem>>, %arg1: memref<9x128xf32, #tpu.memory_space<vmem>>, %arg2: memref<1xf32, #tpu.memory_space<smem>>, %arg3: memref<16x128xf32, #tpu.memory_space<vmem>>) attributes {dimension_semantics = [], scalar_prefetch = 0 : i64, scratch_operands = 0 : i64, tpu.core_type = #tpu.core_type<tc>} {
    %c0 = arith.constant 0 : index
    %c0_0 = arith.constant 0 : index
    %0 = vector.load %arg0[%c0, %c0_0] : memref<16x128xf32, #tpu.memory_space<vmem>>, vector<16x128xf32>
    %1 = tpu.iota {dimensions = array<i32: 1>} : vector<16x128xi32>
    %c16_i32 = arith.constant 16 : i32
    %c0_i32 = arith.constant 0 : i32
    %2 = arith.cmpi eq, %c16_i32, %c0_i32 : i32
    %c1_i32 = arith.constant 1 : i32
    %3 = arith.select %2, %c1_i32, %c16_i32 : i32
    %4 = vector.broadcast %3 : i32 to vector<16x128xi32>
    %5 = arith.remsi %1, %4 : vector<16x128xi32>
    %c0_i32_1 = arith.constant 0 : i32
    %6 = vector.broadcast %c0_i32_1 : i32 to vector<16x128xi32>
    %7 = arith.cmpi ne, %5, %6 : vector<16x128xi32>
    %c0_i32_2 = arith.constant 0 : i32
    %8 = vector.broadcast %c0_i32_2 : i32 to vector<16x128xi32>
    %9 = arith.cmpi slt, %5, %8 : vector<16x128xi32>
    %c0_i32_3 = arith.constant 0 : i32
    %10 = arith.cmpi slt, %3, %c0_i32_3 : i32
    %11 = vector.broadcast %10 : i1 to vector<16x128xi1>
    %12 = vector.broadcast %11 : vector<16x128xi1> to vector<16x128xi1>
    %13 = arith.xori %9, %12 : vector<16x128xi1>
    %14 = arith.andi %13, %7 : vector<16x128xi1>
    %15 = vector.broadcast %3 : i32 to vector<16x128xi32>
    %16 = arith.addi %5, %15 : vector<16x128xi32>
    %17 = arith.select %14, %16, %5 : vector<16x128xi1>, vector<16x128xi32>
    %c0_i32_4 = arith.constant 0 : i32
    %18 = vector.broadcast %c0_i32_4 : i32 to vector<16x128xi32>
    %19 = arith.cmpi eq, %17, %18 : vector<16x128xi32>
    %cst = arith.constant 0.000000e+00 : f32
    %20 = vector.broadcast %cst : f32 to vector<16x1xf32>
    %21 = vector.extract_strided_slice %0 {offsets = [0, 0], sizes = [16, 127], strides = [1, 1]} : vector<16x128xf32> to vector<16x127xf32>
    %22 = tpu.concatenate %20, %21 in 1 : vector<16x1xf32>, vector<16x127xf32> -> vector<16x128xf32>
    %cst_5 = arith.constant 0.000000e+00 : f32
    %23 = vector.broadcast %cst_5 : f32 to vector<16x128xf32>
    %24 = arith.select %19, %23, %22 : vector<16x128xi1>, vector<16x128xf32>
    %c15_i32 = arith.constant 15 : i32
    %25 = vector.broadcast %c15_i32 : i32 to vector<16x128xi32>
    %26 = arith.cmpi eq, %17, %25 : vector<16x128xi32>
    %27 = vector.extract_strided_slice %0 {offsets = [0, 1], sizes = [16, 127], strides = [1, 1]} : vector<16x128xf32> to vector<16x127xf32>
    %cst_6 = arith.constant 0.000000e+00 : f32
    %28 = vector.broadcast %cst_6 : f32 to vector<16x1xf32>
    %29 = tpu.concatenate %27, %28 in 1 : vector<16x127xf32>, vector<16x1xf32> -> vector<16x128xf32>
    %cst_7 = arith.constant 0.000000e+00 : f32
    %30 = vector.broadcast %cst_7 : f32 to vector<16x128xf32>
    %31 = arith.select %26, %30, %29 : vector<16x128xi1>, vector<16x128xf32>
    %c0_8 = arith.constant 0 : index
    %c0_9 = arith.constant 0 : index
    %32 = vector.load %arg1[%c0_8, %c0_9] : memref<9x128xf32, #tpu.memory_space<vmem>>, vector<1x128xf32>
    %33 = vector.shape_cast %32 : vector<1x128xf32> to vector<128xf32>
    %34 = vector.shape_cast %33 : vector<128xf32> to vector<1x128xf32>
    %35 = vector.broadcast %34 : vector<1x128xf32> to vector<16x128xf32>
    %36 = arith.mulf %24, %35 : vector<16x128xf32>
    %c1 = arith.constant 1 : index
    %c0_10 = arith.constant 0 : index
    %37 = vector.load %arg1[%c1, %c0_10] : memref<9x128xf32, #tpu.memory_space<vmem>>, vector<1x128xf32>
    %38 = vector.shape_cast %37 : vector<1x128xf32> to vector<128xf32>
    %39 = vector.shape_cast %38 : vector<128xf32> to vector<1x128xf32>
    %40 = vector.broadcast %39 : vector<1x128xf32> to vector<16x128xf32>
    %41 = arith.mulf %0, %40 : vector<16x128xf32>
    %42 = arith.addf %36, %41 : vector<16x128xf32>
    %c2 = arith.constant 2 : index
    %c0_11 = arith.constant 0 : index
    %43 = vector.load %arg1[%c2, %c0_11] : memref<9x128xf32, #tpu.memory_space<vmem>>, vector<1x128xf32>
    %44 = vector.shape_cast %43 : vector<1x128xf32> to vector<128xf32>
    %45 = vector.shape_cast %44 : vector<128xf32> to vector<1x128xf32>
    %46 = vector.broadcast %45 : vector<1x128xf32> to vector<16x128xf32>
    %47 = arith.mulf %31, %46 : vector<16x128xf32>
    %48 = arith.addf %42, %47 : vector<16x128xf32>
    %c3 = arith.constant 3 : index
    %c0_12 = arith.constant 0 : index
    %49 = vector.load %arg1[%c3, %c0_12] : memref<9x128xf32, #tpu.memory_space<vmem>>, vector<1x128xf32>
    %50 = vector.shape_cast %49 : vector<1x128xf32> to vector<128xf32>
    %51 = vector.shape_cast %50 : vector<128xf32> to vector<1x128xf32>
    %52 = vector.broadcast %51 : vector<1x128xf32> to vector<16x128xf32>
    %53 = arith.mulf %24, %52 : vector<16x128xf32>
    %c4 = arith.constant 4 : index
    %c0_13 = arith.constant 0 : index
    %54 = vector.load %arg1[%c4, %c0_13] : memref<9x128xf32, #tpu.memory_space<vmem>>, vector<1x128xf32>
    %55 = vector.shape_cast %54 : vector<1x128xf32> to vector<128xf32>
    %56 = vector.shape_cast %55 : vector<128xf32> to vector<1x128xf32>
    %57 = vector.broadcast %56 : vector<1x128xf32> to vector<16x128xf32>
    %58 = arith.mulf %0, %57 : vector<16x128xf32>
    %59 = arith.addf %53, %58 : vector<16x128xf32>
    %c5 = arith.constant 5 : index
    %c0_14 = arith.constant 0 : index
    %60 = vector.load %arg1[%c5, %c0_14] : memref<9x128xf32, #tpu.memory_space<vmem>>, vector<1x128xf32>
    %61 = vector.shape_cast %60 : vector<1x128xf32> to vector<128xf32>
    %62 = vector.shape_cast %61 : vector<128xf32> to vector<1x128xf32>
    %63 = vector.broadcast %62 : vector<1x128xf32> to vector<16x128xf32>
    %64 = arith.mulf %31, %63 : vector<16x128xf32>
    %65 = arith.addf %59, %64 : vector<16x128xf32>
    %c6 = arith.constant 6 : index
    %c0_15 = arith.constant 0 : index
    %66 = vector.load %arg1[%c6, %c0_15] : memref<9x128xf32, #tpu.memory_space<vmem>>, vector<1x128xf32>
    %67 = vector.shape_cast %66 : vector<1x128xf32> to vector<128xf32>
    %68 = vector.shape_cast %67 : vector<128xf32> to vector<1x128xf32>
    %69 = vector.broadcast %68 : vector<1x128xf32> to vector<16x128xf32>
    %70 = arith.mulf %24, %69 : vector<16x128xf32>
    %c7 = arith.constant 7 : index
    %c0_16 = arith.constant 0 : index
    %71 = vector.load %arg1[%c7, %c0_16] : memref<9x128xf32, #tpu.memory_space<vmem>>, vector<1x128xf32>
    %72 = vector.shape_cast %71 : vector<1x128xf32> to vector<128xf32>
    %73 = vector.shape_cast %72 : vector<128xf32> to vector<1x128xf32>
    %74 = vector.broadcast %73 : vector<1x128xf32> to vector<16x128xf32>
    %75 = arith.mulf %0, %74 : vector<16x128xf32>
    %76 = arith.addf %70, %75 : vector<16x128xf32>
    %c8 = arith.constant 8 : index
    %c0_17 = arith.constant 0 : index
    %77 = vector.load %arg1[%c8, %c0_17] : memref<9x128xf32, #tpu.memory_space<vmem>>, vector<1x128xf32>
    %78 = vector.shape_cast %77 : vector<1x128xf32> to vector<128xf32>
    %79 = vector.shape_cast %78 : vector<128xf32> to vector<1x128xf32>
    %80 = vector.broadcast %79 : vector<1x128xf32> to vector<16x128xf32>
    %81 = arith.mulf %31, %80 : vector<16x128xf32>
    %82 = arith.addf %76, %81 : vector<16x128xf32>
    %cst_18 = arith.constant 0.000000e+00 : f32
    %83 = vector.broadcast %cst_18 : f32 to vector<1x128xf32>
    %84 = vector.extract_strided_slice %48 {offsets = [0, 0], sizes = [15, 128], strides = [1, 1]} : vector<16x128xf32> to vector<15x128xf32>
    %85 = tpu.concatenate %83, %84 in 0 : vector<1x128xf32>, vector<15x128xf32> -> vector<16x128xf32>
    %86 = arith.addf %85, %65 : vector<16x128xf32>
    %87 = vector.extract_strided_slice %82 {offsets = [1, 0], sizes = [15, 128], strides = [1, 1]} : vector<16x128xf32> to vector<15x128xf32>
    %cst_19 = arith.constant 0.000000e+00 : f32
    %88 = vector.broadcast %cst_19 : f32 to vector<1x128xf32>
    %89 = tpu.concatenate %87, %88 in 0 : vector<15x128xf32>, vector<1x128xf32> -> vector<16x128xf32>
    %90 = arith.addf %86, %89 : vector<16x128xf32>
    %91 = vector.extract_strided_slice %90 {offsets = [0, 16], sizes = [16, 112], strides = [1, 1]} : vector<16x128xf32> to vector<16x112xf32>
    %cst_20 = arith.constant 0.000000e+00 : f32
    %92 = vector.broadcast %cst_20 : f32 to vector<16x16xf32>
    %93 = tpu.concatenate %91, %92 in 1 : vector<16x112xf32>, vector<16x16xf32> -> vector<16x128xf32>
    %94 = arith.addf %90, %93 : vector<16x128xf32>
    %95 = vector.extract_strided_slice %94 {offsets = [0, 32], sizes = [16, 96], strides = [1, 1]} : vector<16x128xf32> to vector<16x96xf32>
    %cst_21 = arith.constant 0.000000e+00 : f32
    %96 = vector.broadcast %cst_21 : f32 to vector<16x32xf32>
    %97 = tpu.concatenate %95, %96 in 1 : vector<16x96xf32>, vector<16x32xf32> -> vector<16x128xf32>
    %98 = arith.addf %94, %97 : vector<16x128xf32>
    %99 = vector.extract_strided_slice %98 {offsets = [0, 64], sizes = [16, 64], strides = [1, 1]} : vector<16x128xf32> to vector<16x64xf32>
    %cst_22 = arith.constant 0.000000e+00 : f32
    %100 = vector.broadcast %cst_22 : f32 to vector<16x64xf32>
    %101 = tpu.concatenate %99, %100 in 1 : vector<16x64xf32>, vector<16x64xf32> -> vector<16x128xf32>
    %102 = arith.addf %98, %101 : vector<16x128xf32>
    %c0_23 = arith.constant 0 : index
    %103 = memref.load %arg2[%c0_23] : memref<1xf32, #tpu.memory_space<smem>>
    %cst_24 = arith.constant 2.500000e-01 : f32
    %104 = arith.addf %103, %cst_24 : f32
    %105 = vector.broadcast %104 : f32 to vector<16x128xf32>
    %106 = arith.addf %102, %105 : vector<16x128xf32>
    %cst_25 = arith.constant 0.000000e+00 : f32
    %107 = vector.broadcast %cst_25 : f32 to vector<16x128xf32>
    %108 = arith.maximumf %106, %107 : vector<16x128xf32>
    %c0_26 = arith.constant 0 : index
    %c0_27 = arith.constant 0 : index
    %109 = vector.load %arg3[%c0_26, %c0_27] : memref<16x128xf32, #tpu.memory_space<vmem>>, vector<16x128xf32>
    tpu.vector_store %arg3[%c0_26, %c0_27], %108 {strides = array<i32>} : memref<16x128xf32, #tpu.memory_space<vmem>>, vector<16x128xf32>,
    return
  }
}

</mosaic_0001>

<llo_original>
// kernel: conv_add_relu.1
$region0: #{conv_add_relu.1}
  #allocation0 [shape = 'u32[]', space=smem, size = 0x4, offset = 0x4, fixed_abs, tag = 'smem constant byte address 0x4 - core index']
  #allocation1 [shape = 'u32[144,128]{1,0:T(1,128)}', space=vmem, size = 0x12000, scoped, tag = 'internal scratch']
  #allocation2 [shape = 'f32[1]{0:T(128)S(6)}', space=smem, size = 0x200, scoped, tag = 'scoped memory for conv_add_relu.1']
  %s0 = inlined_call_operand.vmem [shape: f32[16,128], index: 0, kind: input, shape index: {}]
  %s1 = inlined_call_operand.vmem [shape: f32[9,128], index: 1, kind: input, shape index: {}]
  %s2 = inlined_call_operand.<no memory space> [shape: f32[1], index: 2, kind: input, shape index: {}]
  %s3 = inlined_call_operand.vmem [shape: f32[16,128], index: 3, kind: output, shape index: {}]
  %s4 = sld [smem:[#allocation0]]
  $region22: #{conv_add_relu.1} parent=0
    _
  %s6 = ssub.s32 1, %s4
  %s7 = scalar_select 0, %s6, %s4
  %8 = sst [smem:[#allocation2]] %s2
  // Predicated region
  $region2: #{conv_add_relu.1} parent=0 // pred_check
    _
  $region3: #{conv_add_relu.1} parent=0 // pred_check_branch
    %10 = sbr.rel (0) target = $region5
  $region4: #{conv_add_relu.1} parent=0 // pred_region
    _
  $region5: #{conv_add_relu.1} parent=0 // pred_fallthru
    _
  // Predicated region
  $region6: #{conv_add_relu.1} parent=0 // pred_check
    _
  $region7: #{conv_add_relu.1} parent=0 // pred_check_branch
    %12 = sbr.rel (0) target = $region9
  $region8: #{conv_add_relu.1} parent=0 // pred_region
    _
  $region9: #{conv_add_relu.1} parent=0 // pred_fallthru
    _
  // Predicated region
  $region10: #{conv_add_relu.1} parent=0 // pred_check
    _
  $region11: #{conv_add_relu.1} parent=0 // pred_check_branch
    %14 = sbr.rel (0) target = $region13
  $region12: #{conv_add_relu.1} parent=0 // pred_region
    _
  $region13: #{conv_add_relu.1} parent=0 // pred_fallthru
    _
  %v15 = vld [vmem:[%s0] sm:$0xff]
  %v16 = vld [vmem:[%s0 + $0x8] sm:$0xff]
  %v17 = vlaneseq
  %v18 = vand.u32 %v17, 127
  %vm19 = vcmp.lt.s32.totalorder %v18, 0
  %v20 = vsub.s32 0, %v18
  %v21 = vsel %vm19, %v20, %v18
  %v22 = vshrl.u32 %v21, 4
  %v23 = vand.u32 %v21, 15
  %v24 = vsub.s32 0, %v23
  %v25 = vsel %vm19, %v24, %v23
  %vm26 = vcmp.ne.s32.totalorder %v25, 0
  %vm27 = vcmp.lt.s32.totalorder %v25, 0
  %vm28 = vmand %vm27, %vm26
  %v29 = vadd.s32 %v25, 16
  %v30 = vsel %vm28, %v29, %v25
  %vm31 = vcmp.eq.s32.totalorder %v30, 0
  %34 = vrot.lane.b32.xlu0 %v15, 1
  %v35 = vpop.permute.xlu0 %34
  %36 = vrot.lane.b32.xlu0 %v16, 1
  %v37 = vpop.permute.xlu0 %36
  %vm40 = vcmask 7168
  %v41 = vsel %vm40, 0.0, %v35
  %v42 = vsel %vm40, 0.0, %v37
  %v43 = vsel %vm31, 0.0, %v41
  %v44 = vsel %vm31, 0.0, %v42
  %vm45 = vcmp.eq.s32.totalorder %v30, 15
  %46 = vrot.lane.b32.xlu0 %v15, 127
  %v47 = vpop.permute.xlu0 %46
  %48 = vrot.lane.b32.xlu0 %v16, 127
  %v49 = vpop.permute.xlu0 %48
  %vm52 = vcmask 1039360
  %v53 = vsel %vm52, %v47, 0.0
  %v54 = vsel %vm52, %v49, 0.0
  %v55 = vsel %vm45, 0.0, %v53
  %v56 = vsel %vm45, 0.0, %v54
  %v57 = vld [vmem:[%s1] sm:$0x1]
  %v58 = vlaneseq
  %v59 = vshrl.u32 %v58, 7
  %v60 = vsub.s32 0, %v59
  %v61 = vrot.slane %v57, %v60
  %v62 = vmul.f32 %v43, %v61
  %v63 = vmul.f32 %v44, %v61
  %v64 = vld [vmem:[%s1 + $0x1] sm:$0x1]
  %v65 = vlaneseq
  %v66 = vshrl.u32 %v65, 7
  %v67 = vsub.s32 0, %v66
  %v68 = vrot.slane %v64, %v67
  %v69 = vmul.f32 %v15, %v68
  %v70 = vmul.f32 %v16, %v68
  %v71 = vadd.f32 %v62, %v69
  %v72 = vadd.f32 %v63, %v70
  %v73 = vld [vmem:[%s1 + $0x2] sm:$0x1]
  %v74 = vlaneseq
  %v75 = vshrl.u32 %v74, 7
  %v76 = vsub.s32 0, %v75
  %v77 = vrot.slane %v73, %v76
  %v78 = vmul.f32 %v55, %v77
  %v79 = vmul.f32 %v56, %v77
  %v80 = vadd.f32 %v71, %v78
  %v81 = vadd.f32 %v72, %v79
  %v82 = vld [vmem:[%s1 + $0x3] sm:$0x1]
  %v83 = vlaneseq
  %v84 = vshrl.u32 %v83, 7
  %v85 = vsub.s32 0, %v84
  %v86 = vrot.slane %v82, %v85
  %v87 = vmul.f32 %v43, %v86
  %v88 = vmul.f32 %v44, %v86
  %v89 = vld [vmem:[%s1 + $0x4] sm:$0x1]
  %v90 = vlaneseq
  %v91 = vshrl.u32 %v90, 7
  %v92 = vsub.s32 0, %v91
  %v93 = vrot.slane %v89, %v92
  %v94 = vmul.f32 %v15, %v93
  %v95 = vmul.f32 %v16, %v93
  %v96 = vadd.f32 %v87, %v94
  %v97 = vadd.f32 %v88, %v95
  %v98 = vld [vmem:[%s1 + $0x5] sm:$0x1]
  %v99 = vlaneseq
  %v100 = vshrl.u32 %v99, 7
  %v101 = vsub.s32 0, %v100
  %v102 = vrot.slane %v98, %v101
  %v103 = vmul.f32 %v55, %v102
  %v104 = vmul.f32 %v56, %v102
  %v105 = vadd.f32 %v96, %v103
  %v106 = vadd.f32 %v97, %v104
  %v107 = vld [vmem:[%s1 + $0x6] sm:$0x1]
  %v108 = vlaneseq
  %v109 = vshrl.u32 %v108, 7
  %v110 = vsub.s32 0, %v109
  %v111 = vrot.slane %v107, %v110
  %v112 = vmul.f32 %v43, %v111
  %v113 = vmul.f32 %v44, %v111
  %v114 = vld [vmem:[%s1 + $0x7] sm:$0x1]
  %v115 = vlaneseq
  %v116 = vshrl.u32 %v115, 7
  %v117 = vsub.s32 0, %v116
  %v118 = vrot.slane %v114, %v117
  %v119 = vmul.f32 %v15, %v118
  %v120 = vmul.f32 %v16, %v118
  %v121 = vadd.f32 %v112, %v119
  %v122 = vadd.f32 %v113, %v120
  %v123 = vld [vmem:[%s1 + $0x8] sm:$0x1]
  %v124 = vlaneseq
  %v125 = vshrl.u32 %v124, 7
  %v126 = vsub.s32 0, %v125
  %v127 = vrot.slane %v123, %v126
  %v128 = vmul.f32 %v55, %v127
  %v129 = vmul.f32 %v56, %v127
  %v130 = vadd.f32 %v121, %v128
  %v131 = vadd.f32 %v122, %v129
  %vm134 = vcmask 1040384
  %v135 = vrot.slane %v80, 7
  %v136 = vrot.slane %v81, 7
  %v137 = vsel %vm134, %v135, %v136
  %v140 = vsel %vm134, 0.0, %v135
  %v141 = vadd.f32 %v140, %v105
  %v142 = vadd.f32 %v137, %v106
  %vm145 = vcmask 1046528
  %v146 = vrot.slane %v130, 1
  %v147 = vrot.slane %v131, 1
  %v148 = vsel %vm145, %v146, %v147
  %v151 = vsel %vm145, %v147, 0.0
  %v152 = vadd.f32 %v141, %v148
  %v153 = vadd.f32 %v142, %v151
  %156 = vrot.lane.b32.xlu0 %v152, 112
  %v157 = vpop.permute.xlu0 %156
  %158 = vrot.lane.b32.xlu0 %v153, 112
  %v159 = vpop.permute.xlu0 %158
  %vm162 = vcmask 916480
  %v163 = vsel %vm162, %v157, 0.0
  %v164 = vsel %vm162, %v159, 0.0
  %v165 = vadd.f32 %v152, %v163
  %v166 = vadd.f32 %v153, %v164
  %169 = vrot.lane.b32.xlu0 %v165, 96
  %v170 = vpop.permute.xlu0 %169
  %171 = vrot.lane.b32.xlu0 %v166, 96
  %v172 = vpop.permute.xlu0 %171
  %vm175 = vcmask 785408
  %v176 = vsel %vm175, %v170, 0.0
  %v177 = vsel %vm175, %v172, 0.0
  %v178 = vadd.f32 %v165, %v176
  %v179 = vadd.f32 %v166, %v177
  %182 = vrot.lane.b32.xlu0 %v178, 64
  %v183 = vpop.permute.xlu0 %182
  %184 = vrot.lane.b32.xlu0 %v179, 64
  %v185 = vpop.permute.xlu0 %184
  %vm188 = vcmask 523264
  %v189 = vsel %vm188, %v183, 0.0
  %v190 = vsel %vm188, %v185, 0.0
  %v191 = vadd.f32 %v178, %v189
  %v192 = vadd.f32 %v179, %v190
  %s193 = sld [smem:[#allocation2]]
  %s194 = sadd.f32 %s193, 0.25
  %v195 = vstv %s194
  %v196 = vadd.f32 %v191, %v195
  %v197 = vadd.f32 %v192, %v195
  %v198 = vmax.f32 %v196, 0.0
  %v199 = vmax.f32 %v197, 0.0
  %200 = vst [vmem:[%s3] sm:$0xff] %v198
  %201 = vst [vmem:[%s3 + $0x8] sm:$0xff] %v199
  // Predicated region
  $region14: #{conv_add_relu.1} parent=0 // pred_check
    _
  $region15: #{conv_add_relu.1} parent=0 // pred_check_branch
    %203 = sbr.rel (0) target = $region17
  $region16: #{conv_add_relu.1} parent=0 // pred_region
    _
  $region17: #{conv_add_relu.1} parent=0 // pred_fallthru
    _
  // Predicated region
  $region18: #{conv_add_relu.1} parent=0 // pred_check
    _
  $region19: #{conv_add_relu.1} parent=0 // pred_check_branch
    %205 = sbr.rel (0) target = $region21
  $region20: #{conv_add_relu.1} parent=0 // pred_region
    _
  $region21: #{conv_add_relu.1} parent=0 // pred_fallthru
    _

</llo_original>
